<compile_context>
chip_gen: v5e
topology: v5e:2x2
jax: 0.10.0
libtpu: 0.0.40
codegen_flags: <defaults>
</compile_context>

<pallas_src>
import functools

import jax
import jax.numpy as jnp
from jax.experimental import pallas as pl
from jax.experimental.pallas import tpu as pltpu

_LANE = 128


def _round_up(x, m):
    return ((x + m - 1) // m) * m


def _mlp_kernel(n_layers, *refs):
    """Kernel body.

    refs layout:
      obs_ref                              (TILE_B, ob_dim)        bf16 (or f32)
      (w_ref, b_ref) * n_layers            hidden layers (Tanh)    w bf16, b f32 (1, layer_size)
      w_out_ref, b_out_ref                 output layer (Identity) padded to lane-dense width
      out_ref                              (TILE_B, ac_pad)        f32 mean or logits (padded)
    """
    obs_ref = refs[0]
    idx = 1
    layers = []
    for _ in range(n_layers + 1):
        layers.append((refs[idx], refs[idx + 1]))
        idx += 2
    out_ref = refs[idx]

    h = obs_ref[...]
    for li, (w_ref, b_ref) in enumerate(layers):
        # bf16 x bf16 matmul on the MXU with f32 accumulation; bias add / tanh in f32.
        z = (
            jnp.dot(
                h.astype(w_ref.dtype),
                w_ref[...],
                preferred_element_type=jnp.float32,
            )
            + b_ref[...].astype(jnp.float32)
        )
        if li < n_layers:
            h = jnp.tanh(z)
        else:
            out_ref[...] = z.astype(out_ref.dtype)


def mlp_policy_forward(obs, params, *, discrete, tile_b=512, compute_dtype=jnp.bfloat16):
    """Runs the MLPPolicy forward pass.

    obs: (B, ob_dim) float32
    params: dict with 'weights' (list of (in,out) mats), 'biases' (list of (out,) vecs),
            and 'logstd' ((ac_dim,)) if not discrete.
    Returns:
      discrete   -> logits (B, ac_dim)
      continuous -> (mean (B, ac_dim), batch_scale_tril (B, ac_dim, ac_dim))
    """
    weights = params["weights"]
    biases = params["biases"]
    n_layers = len(weights) - 1
    B, ob_dim = obs.shape
    ac_dim = weights[-1].shape[1]

    # --- batch tiling (pad tail tile with zero rows) ---
    tb = min(tile_b, _round_up(max(B, 1), 8))
    B_pad = _round_up(B, tb)
    grid = (B_pad // tb,)

    obs_p = obs
    if B_pad != B:
        obs_p = jnp.pad(obs, ((0, B_pad - B), (0, 0)))
    obs_p = obs_p.astype(compute_dtype)

    # --- lane-dense output: pad last layer to a multiple of 128 output columns ---
    ac_pad = _round_up(ac_dim, _LANE)

    kernel_inputs = [obs_p]
    in_specs = [pl.BlockSpec((tb, ob_dim), lambda i: (i, 0))]
    # TODO(synk): if xprof ever shows exposed DMA on the obs stream at very large B, add
    # pipeline_mode=pl.Buffered(3) to the obs BlockSpec above.

    flops = 0
    weight_bytes = 0
    for li, (w, b) in enumerate(zip(weights, biases)):
        if li == n_layers:  # output layer: zero-pad to lane-dense width
            w = jnp.pad(w, ((0, 0), (0, ac_pad - ac_dim)))
            b = jnp.pad(b, (0, ac_pad - ac_dim))
        w = w.astype(compute_dtype)
        b2d = b.reshape(1, -1).astype(jnp.float32)
        kernel_inputs += [w, b2d]
        # Constant index_map -> weights/biases resident in VMEM, not re-DMA'd per grid step.
        in_specs += [
            pl.BlockSpec(w.shape, lambda i: (0, 0)),
            pl.BlockSpec(b2d.shape, lambda i: (0, 0)),
        ]
        flops += 2 * B_pad * w.shape[0] * w.shape[1]
        weight_bytes += w.size * w.dtype.itemsize + b2d.size * b2d.dtype.itemsize

    out_shape = jax.ShapeDtypeStruct((B_pad, ac_pad), jnp.float32)
    out_specs = pl.BlockSpec((tb, ac_pad), lambda i: (i, 0))

    cost = pl.CostEstimate(
        flops=flops,
        transcendentals=B_pad * n_layers * (weights[0].shape[1] if n_layers > 0 else 0),
        bytes_accessed=(
            obs_p.size * obs_p.dtype.itemsize + weight_bytes + B_pad * ac_pad * 4
        ),
    )

    kernel = functools.partial(_mlp_kernel, n_layers)

    out_padded = pl.pallas_call(
        kernel,
        out_shape=out_shape,
        grid=grid,
        in_specs=in_specs,
        out_specs=out_specs,
        compiler_params=pltpu.CompilerParams(dimension_semantics=("parallel",)),
        cost_estimate=cost,
    )(*kernel_inputs)

    out = out_padded[:B, :ac_dim]

    if discrete:
        return out

    # Distribution bookkeeping (tiny, grid-invariant) stays in plain JAX.
    std = jnp.exp(params["logstd"].astype(jnp.float32))          # (ac_dim,)
    scale_tril = jnp.diag(std)                                   # diag(exp(logstd))
    batch_scale_tril = jnp.broadcast_to(scale_tril, (B, ac_dim, ac_dim))
    return out, batch_scale_tril


def init_params(key, ob_dim, ac_dim, n_layers, layer_size, discrete):
    """Deterministic PyTorch-Linear-style init (uniform(-1/sqrt(fan_in), 1/sqrt(fan_in)))."""
    dims = [ob_dim] + [layer_size] * n_layers + [ac_dim]
    weights, biases = [], []
    for i in range(len(dims) - 1):
        fan_in, fan_out = dims[i], dims[i + 1]
        key, kw, kb = jax.random.split(key, 3)
        bound = 1.0 / jnp.sqrt(fan_in)
        # stored pre-transposed: (in_features, out_features)
        weights.append(jax.random.uniform(kw, (fan_in, fan_out), jnp.float32, -bound, bound))
        biases.append(jax.random.uniform(kb, (fan_out,), jnp.float32, -bound, bound))
    params = {"weights": weights, "biases": biases}
    if not discrete:
        params["logstd"] = jnp.zeros((ac_dim,), jnp.float32)  # nn.Parameter(torch.zeros(ac_dim))
    return params


def _ref_forward(obs, weights, biases, compute_dtype):
    """Plain-JAX reference with the same bf16 input rounding as the kernel (f32 accumulation)."""
    h = obs.astype(compute_dtype).astype(jnp.float32)
    n_layers = len(weights) - 1
    for li, (w, b) in enumerate(zip(weights, biases)):
        wq = w.astype(compute_dtype).astype(jnp.float32)
        z = h.astype(compute_dtype).astype(jnp.float32) @ wq + b
        h = jnp.tanh(z) if li < n_layers else z
    return h


if __name__ == "__main__":
    key = jax.random.PRNGKey(0)

    # Small shapes consistent with the module's __init__
    batch = 8
    ob_dim = 16
    ac_dim = 4
    n_layers = 2
    layer_size = 32

    key, k_obs, k_params = jax.random.split(key, 3)
    obs = jax.random.normal(k_obs, (batch, ob_dim), jnp.float32)

    # Continuous branch: MultivariateNormal(loc=mean, scale_tril=diag(exp(logstd)) per batch)
    params_c = init_params(k_params, ob_dim, ac_dim, n_layers, layer_size, discrete=False)
    mean, batch_scale_tril = mlp_policy_forward(obs, params_c, discrete=False)
    jax.block_until_ready(mean)
    jax.block_until_ready(batch_scale_tril)

    mean_ref = _ref_forward(obs, params_c["weights"], params_c["biases"], jnp.bfloat16)
    assert mean.shape == (batch, ac_dim)
    assert batch_scale_tril.shape == (batch, ac_dim, ac_dim)
    assert jnp.allclose(mean, mean_ref, atol=1e-2), "mean mismatch"
    assert jnp.allclose(batch_scale_tril[0], jnp.eye(ac_dim), atol=1e-6)  # logstd = 0 -> std = 1

    # Discrete branch: Categorical(logits=logits_net(obs))
    params_d = init_params(k_params, ob_dim, ac_dim, n_layers, layer_size, discrete=True)
    logits = mlp_policy_forward(obs, params_d, discrete=True)
    jax.block_until_ready(logits)
    assert logits.shape == (batch, ac_dim)
    assert jnp.allclose(logits, mean, atol=1e-6)  # same net init -> same output

    # Larger, non-tile-aligned batch to exercise the grid + tail padding path.
    key, k_big = jax.random.split(key)
    big_batch = 1000  # not a multiple of 512 -> pads to 1024, grid=(2,)
    obs_big = jax.random.normal(k_big, (big_batch, ob_dim), jnp.float32)
    mean_big, _ = mlp_policy_forward(obs_big, params_c, discrete=False)
    jax.block_until_ready(mean_big)
    mean_big_ref = _ref_forward(obs_big, params_c["weights"], params_c["biases"], jnp.bfloat16)
    assert mean_big.shape == (big_batch, ac_dim)
    assert jnp.allclose(mean_big, mean_big_ref, atol=1e-2), "big-batch mean mismatch"

    # TODO(synk): torch.distributions Categorical / MultivariateNormal object construction and
    # .sample()/.rsample() have no Pallas equivalent; the kernel returns the distribution
    # parameters (logits, or mean + scale_tril) that fully determine them.
    print("KERNEL_OK")
</pallas_src>

<mosaic_0001>
module attributes {stable_mosaic.version = 11 : i64} {
  func.func @_mlp_kernel(%arg0: i32, %arg1: memref<8x16xbf16, #tpu.memory_space<vmem>>, %arg2: memref<16x32xbf16, #tpu.memory_space<vmem>>, %arg3: memref<1x32xf32, #tpu.memory_space<vmem>>, %arg4: memref<32x32xbf16, #tpu.memory_space<vmem>>, %arg5: memref<1x32xf32, #tpu.memory_space<vmem>>, %arg6: memref<32x128xbf16, #tpu.memory_space<vmem>>, %arg7: memref<1x128xf32, #tpu.memory_space<vmem>>, %arg8: memref<8x128xf32, #tpu.memory_space<vmem>>) attributes {dimension_semantics = [#tpu.dimension_semantics<parallel>], iteration_bounds = array<i64: 1>, scalar_prefetch = 0 : i64, scratch_operands = 0 : i64, tpu.core_type = #tpu.core_type<tc>, window_params = [{transform_indices = @transform_0, window_bounds = array<i64: 8, 16>}, {pipeline_mode = #tpu.pipeline_mode<synchronous>, transform_indices = @transform_1, window_bounds = array<i64: 16, 32>}, {pipeline_mode = #tpu.pipeline_mode<synchronous>, transform_indices = @transform_2, window_bounds = array<i64: 1, 32>}, {pipeline_mode = #tpu.pipeline_mode<synchronous>, transform_indices = @transform_3, window_bounds = array<i64: 32, 32>}, {pipeline_mode = #tpu.pipeline_mode<synchronous>, transform_indices = @transform_4, window_bounds = array<i64: 1, 32>}, {pipeline_mode = #tpu.pipeline_mode<synchronous>, transform_indices = @transform_5, window_bounds = array<i64: 32, 128>}, {pipeline_mode = #tpu.pipeline_mode<synchronous>, transform_indices = @transform_6, window_bounds = array<i64: 1, 128>}, {transform_indices = @transform_7, window_bounds = array<i64: 8, 128>}]} {
    %c0 = arith.constant 0 : index
    %c0_0 = arith.constant 0 : index
    %0 = vector.load %arg1[%c0, %c0_0] : memref<8x16xbf16, #tpu.memory_space<vmem>>, vector<8x16xbf16>
    %c0_1 = arith.constant 0 : index
    %c0_2 = arith.constant 0 : index
    %1 = vector.load %arg2[%c0_1, %c0_2] : memref<16x32xbf16, #tpu.memory_space<vmem>>, vector<16x32xbf16>
    %cst = arith.constant dense<0.000000e+00> : vector<8x32xf32>
    %2 = tpu.matmul %0, %1, %cst {dimension_numbers = #tpu.dot_dimension_numbers<[1], [0], [0], [1], [0, 0, 1, 1], [], []>} : vector<8x16xbf16>, vector<16x32xbf16>, vector<8x32xf32> -> vector<8x32xf32>
    %c0_3 = arith.constant 0 : index
    %c0_4 = arith.constant 0 : index
    %3 = vector.load %arg3[%c0_3, %c0_4] : memref<1x32xf32, #tpu.memory_space<vmem>>, vector<1x32xf32>
    %4 = vector.broadcast %3 : vector<1x32xf32> to vector<8x32xf32>
    %5 = arith.addf %2, %4 : vector<8x32xf32>
    %6 = math.tanh %5 : vector<8x32xf32>
    %7 = arith.truncf %6 : vector<8x32xf32> to vector<8x32xbf16>
    %c0_5 = arith.constant 0 : index
    %c0_6 = arith.constant 0 : index
    %8 = vector.load %arg4[%c0_5, %c0_6] : memref<32x32xbf16, #tpu.memory_space<vmem>>, vector<32x32xbf16>
    %cst_7 = arith.constant dense<0.000000e+00> : vector<8x32xf32>
    %9 = tpu.matmul %7, %8, %cst_7 {dimension_numbers = #tpu.dot_dimension_numbers<[1], [0], [0], [1], [0, 0, 1, 1], [], []>} : vector<8x32xbf16>, vector<32x32xbf16>, vector<8x32xf32> -> vector<8x32xf32>
    %c0_8 = arith.constant 0 : index
    %c0_9 = arith.constant 0 : index
    %10 = vector.load %arg5[%c0_8, %c0_9] : memref<1x32xf32, #tpu.memory_space<vmem>>, vector<1x32xf32>
    %11 = vector.broadcast %10 : vector<1x32xf32> to vector<8x32xf32>
    %12 = arith.addf %9, %11 : vector<8x32xf32>
    %13 = math.tanh %12 : vector<8x32xf32>
    %14 = arith.truncf %13 : vector<8x32xf32> to vector<8x32xbf16>
    %c0_10 = arith.constant 0 : index
    %c0_11 = arith.constant 0 : index
    %15 = vector.load %arg6[%c0_10, %c0_11] : memref<32x128xbf16, #tpu.memory_space<vmem>>, vector<32x128xbf16>
    %cst_12 = arith.constant dense<0.000000e+00> : vector<8x128xf32>
    %16 = tpu.matmul %14, %15, %cst_12 {dimension_numbers = #tpu.dot_dimension_numbers<[1], [0], [0], [1], [0, 0, 1, 1], [], []>} : vector<8x32xbf16>, vector<32x128xbf16>, vector<8x128xf32> -> vector<8x128xf32>
    %c0_13 = arith.constant 0 : index
    %c0_14 = arith.constant 0 : index
    %17 = vector.load %arg7[%c0_13, %c0_14] : memref<1x128xf32, #tpu.memory_space<vmem>>, vector<1x128xf32>
    %18 = vector.broadcast %17 : vector<1x128xf32> to vector<8x128xf32>
    %19 = arith.addf %16, %18 : vector<8x128xf32>
    %c0_15 = arith.constant 0 : index
    %c0_16 = arith.constant 0 : index
    %20 = vector.load %arg8[%c0_15, %c0_16] : memref<8x128xf32, #tpu.memory_space<vmem>>, vector<8x128xf32>
    tpu.vector_store %arg8[%c0_15, %c0_16], %19 {strides = array<i32>} : memref<8x128xf32, #tpu.memory_space<vmem>>, vector<8x128xf32>,
    return
  }
  func.func @transform_0(%arg0: i32) -> (i32, i32) {
    %c0_i32 = arith.constant 0 : i32
    %c0_i32_0 = arith.constant 0 : i32
    return %arg0, %c0_i32 : i32, i32
  }
  func.func @transform_1(%arg0: i32) -> (i32, i32) {
    %c0_i32 = arith.constant 0 : i32
    %c0_i32_0 = arith.constant 0 : i32
    %c0_i32_1 = arith.constant 0 : i32
    return %c0_i32, %c0_i32_0 : i32, i32
  }
  func.func @transform_2(%arg0: i32) -> (i32, i32) {
    %c0_i32 = arith.constant 0 : i32
    %c0_i32_0 = arith.constant 0 : i32
    %c0_i32_1 = arith.constant 0 : i32
    return %c0_i32, %c0_i32_0 : i32, i32
  }
  func.func @transform_3(%arg0: i32) -> (i32, i32) {
    %c0_i32 = arith.constant 0 : i32
    %c0_i32_0 = arith.constant 0 : i32
    %c0_i32_1 = arith.constant 0 : i32
    return %c0_i32, %c0_i32_0 : i32, i32
  }
  func.func @transform_4(%arg0: i32) -> (i32, i32) {
    %c0_i32 = arith.constant 0 : i32
    %c0_i32_0 = arith.constant 0 : i32
    %c0_i32_1 = arith.constant 0 : i32
    return %c0_i32, %c0_i32_0 : i32, i32
  }
  func.func @transform_5(%arg0: i32) -> (i32, i32) {
    %c0_i32 = arith.constant 0 : i32
    %c0_i32_0 = arith.constant 0 : i32
    %c0_i32_1 = arith.constant 0 : i32
    return %c0_i32, %c0_i32_0 : i32, i32
  }
  func.func @transform_6(%arg0: i32) -> (i32, i32) {
    %c0_i32 = arith.constant 0 : i32
    %c0_i32_0 = arith.constant 0 : i32
    %c0_i32_1 = arith.constant 0 : i32
    return %c0_i32, %c0_i32_0 : i32, i32
  }
  func.func @transform_7(%arg0: i32) -> (i32, i32) {
    %c0_i32 = arith.constant 0 : i32
    %c0_i32_0 = arith.constant 0 : i32
    return %arg0, %c0_i32 : i32, i32
  }
}

</mosaic_0001>

<llo_original>
// kernel: tpu_custom_call.1
$region0: #{tpu_custom_call.1}
  #allocation0 [shape = 'u32[]', space=smem, size = 0x4, offset = 0x4, fixed_abs, tag = 'smem constant byte address 0x4 - core index']
  #allocation1 [shape = 'u32[72,128]{1,0:T(1,128)}', space=vmem, size = 0x9000, scoped, tag = 'internal scratch']
  %s0 = inlined_call_operand.hbm [shape: bf16[8,16], index: 0, kind: input, shape index: {}]
  %s1 = inlined_call_operand.hbm [shape: bf16[16,32], index: 1, kind: input, shape index: {}]
  %s2 = inlined_call_operand.vmem [shape: f32[1,32], index: 2, kind: input, shape index: {}]
  %s3 = inlined_call_operand.hbm [shape: bf16[32,32], index: 3, kind: input, shape index: {}]
  %s4 = inlined_call_operand.vmem [shape: f32[1,32], index: 4, kind: input, shape index: {}]
  %s5 = inlined_call_operand.hbm [shape: bf16[32,128], index: 5, kind: input, shape index: {}]
  %s6 = inlined_call_operand.vmem [shape: f32[1,128], index: 6, kind: input, shape index: {}]
  %s7 = inlined_call_operand.hbm [shape: f32[8,128], index: 7, kind: output, shape index: {}]
  %s8 = sld [smem:[#allocation0]]
  $region54: #{tpu_custom_call.1} parent=0
    _
  %s10 = ssub.s32 1, %s8
  %s11 = scalar_select 0, %s10, %s8
  $region1: #{tpu_custom_call.1} parent=0
    #allocation2 [shape = 'u8[2048]{0}', space=vmem, size = 0x800, scoped, tag = 'input window, operand 0, single buffered']
    #allocation3 [shape = 's32[1]{0}', space=sflag, size = 0x4, scoped, tag = 'scoped memory for tpu_custom_call.1']
    #allocation4 [shape = 's32[1]{0}', space=sflag, size = 0x4, scoped, tag = 'scoped memory for tpu_custom_call.1']
    #allocation5 [shape = 'u8[4096]{0}', space=vmem, size = 0x1000, scoped, tag = 'input window, operand 1, single buffered']
    #allocation6 [shape = 's32[1]{0}', space=sflag, size = 0x4, scoped, tag = 'scoped memory for tpu_custom_call.1']
    #allocation7 [shape = 'u8[8192]{0}', space=vmem, size = 0x2000, scoped, tag = 'input window, operand 3, single buffered']
    #allocation8 [shape = 'u8[8192]{0}', space=vmem, size = 0x2000, scoped, tag = 'input window, operand 5, single buffered']
    #allocation9 [shape = 's32[1]{0}', space=sflag, size = 0x4, scoped, tag = 'scoped memory for tpu_custom_call.1']
    #allocation10 [shape = 'u8[4096]{0}', space=vmem, size = 0x1000, scoped, tag = 'output window, operand 0, single buffered']
    %12 = vsyncpa [#allocation3], 0
    %13 = vsyncpa [#allocation6], 0
    %14 = vsyncpa [#allocation9], 0
    %15 = vsyncpa [#allocation4], 0
    // Predicated region
    $region2: #{tpu_custom_call.1} parent=1 // pred_check
      _
    $region3: #{tpu_custom_call.1} parent=1 // pred_check_branch
      %17 = sbr.rel (0) target = $region5
    $region4: #{tpu_custom_call.1} parent=1 // pred_region
      %19 = vsyncadd [#allocation3], 0
      %s21 = sshll.u32 %s0, 4
      %s22 = int_to_ptr.hbm [resolvable:$true] %s21
      %s23 = sshll.u32 [#allocation2], 4
      %s24 = int_to_ptr.vmem [resolvable:$true] %s23
      %26 = dma.hbm_to_vmem [thread:$0]  %s22, 64, %s24, [#allocation3]
    $region5: #{tpu_custom_call.1} parent=1 // pred_fallthru
      _
    // Predicated region
    $region6: #{tpu_custom_call.1} parent=1 // pred_check
      _
    $region7: #{tpu_custom_call.1} parent=1 // pred_check_branch
      %28 = sbr.rel (0) target = $region9
    $region8: #{tpu_custom_call.1} parent=1 // pred_region
      %30 = vsyncadd [#allocation6], 0
      %s31 = sshll.u32 %s1, 4
      %s32 = int_to_ptr.hbm [resolvable:$true] %s31
      %s33 = sshll.u32 [#allocation5], 4
      %s34 = int_to_ptr.vmem [resolvable:$true] %s33
      %39 = dma.hbm_to_vmem [thread:$0]  %s32, 128, %s34, [#allocation6], 64, 64, 4
    $region9: #{tpu_custom_call.1} parent=1 // pred_fallthru
      _
    // Predicated region
    $region10: #{tpu_custom_call.1} parent=1 // pred_check
      _
    $region11: #{tpu_custom_call.1} parent=1 // pred_check_branch
      %41 = sbr.rel (0) target = $region13
    $region12: #{tpu_custom_call.1} parent=1 // pred_region
      _
    $region13: #{tpu_custom_call.1} parent=1 // pred_fallthru
      _
    // Predicated region
    $region14: #{tpu_custom_call.1} parent=1 // pred_check
      _
    $region15: #{tpu_custom_call.1} parent=1 // pred_check_branch
      %43 = sbr.rel (0) target = $region17
    $region16: #{tpu_custom_call.1} parent=1 // pred_region
      %45 = vsyncadd [#allocation6], 0
      %s46 = sshll.u32 %s3, 4
      %s47 = int_to_ptr.hbm [resolvable:$true] %s46
      %s48 = sshll.u32 [#allocation7], 4
      %s49 = int_to_ptr.vmem [resolvable:$true] %s48
      %54 = dma.hbm_to_vmem [thread:$0]  %s47, 256, %s49, [#allocation6], 64, 64, 4
    $region17: #{tpu_custom_call.1} parent=1 // pred_fallthru
      _
    // Predicated region
    $region18: #{tpu_custom_call.1} parent=1 // pred_check
      _
    $region19: #{tpu_custom_call.1} parent=1 // pred_check_branch
      %56 = sbr.rel (0) target = $region21
    $region20: #{tpu_custom_call.1} parent=1 // pred_region
      _
    $region21: #{tpu_custom_call.1} parent=1 // pred_fallthru
      _
    // Predicated region
    $region22: #{tpu_custom_call.1} parent=1 // pred_check
      _
    $region23: #{tpu_custom_call.1} parent=1 // pred_check_branch
      %58 = sbr.rel (0) target = $region25
    $region24: #{tpu_custom_call.1} parent=1 // pred_region
      %60 = vsyncadd [#allocation9], 0
      %s61 = sshll.u32 %s5, 4
      %s62 = int_to_ptr.hbm [resolvable:$true] %s61
      %s63 = sshll.u32 [#allocation8], 4
      %s64 = int_to_ptr.vmem [resolvable:$true] %s63
      %69 = dma.hbm_to_vmem [thread:$0]  %s62, 256, %s64, [#allocation9], 64, 64, 4
    $region25: #{tpu_custom_call.1} parent=1 // pred_fallthru
      _
    // Predicated region
    $region26: #{tpu_custom_call.1} parent=1 // pred_check
      _
    $region27: #{tpu_custom_call.1} parent=1 // pred_check_branch
      %71 = sbr.rel (0) target = $region29
    $region28: #{tpu_custom_call.1} parent=1 // pred_region
      _
    $region29: #{tpu_custom_call.1} parent=1 // pred_fallthru
      _
    // Predicated region
    $region30: #{tpu_custom_call.1} parent=1 // pred_check
      _
    $region31: #{tpu_custom_call.1} parent=1 // pred_check_branch
      %73 = sbr.rel (0) target = $region33
    $region32: #{tpu_custom_call.1} parent=1 // pred_region
      %75 = dma.done [#allocation3], 64
    $region33: #{tpu_custom_call.1} parent=1 // pred_fallthru
      _
    // Predicated region
    $region34: #{tpu_custom_call.1} parent=1 // pred_check
      _
    $region35: #{tpu_custom_call.1} parent=1 // pred_check_branch
      %77 = sbr.rel (0) target = $region37
    $region36: #{tpu_custom_call.1} parent=1 // pred_region
      %79 = dma.done [#allocation6], 128
    $region37: #{tpu_custom_call.1} parent=1 // pred_fallthru
      _
    // Predicated region
    $region38: #{tpu_custom_call.1} parent=1 // pred_check
      _
    $region39: #{tpu_custom_call.1} parent=1 // pred_check_branch
      %81 = sbr.rel (0) target = $region41
    $region40: #{tpu_custom_call.1} parent=1 // pred_region
      %83 = dma.done [#allocation6], 256
    $region41: #{tpu_custom_call.1} parent=1 // pred_fallthru
      _
    // Predicated region
    $region42: #{tpu_custom_call.1} parent=1 // pred_check
      _
    $region43: #{tpu_custom_call.1} parent=1 // pred_check_branch
      %85 = sbr.rel (0) target = $region45
    $region44: #{tpu_custom_call.1} parent=1 // pred_region
      %87 = dma.done [#allocation9], 256
    $region45: #{tpu_custom_call.1} parent=1 // pred_fallthru
      _
    %v89 = vld [vmem:[#allocation2] sm:$0xf]
    %v90 = vld [vmem:[#allocation5] sm:$0xf]
    %v91 = vld [vmem:[#allocation5 + $0x4] sm:$0xf]
    %v92 = vld [vmem:[%s2] sm:$0x1]
    %v94 = vperm.slane %v92, 0
    %v98 = vunpack.c.l.b16 %v90
    %v99 = vunpack.c.l.b16 %v91
    %v100 = vpack.c.b16 %v99, %v98
    %vm102 = vcmask 130048
    %v104 = vsel %vm102, %v89, 0
    %106 = vmatpush.bf16.msra.mxu0 0
    %107 = vmatpush.bf16.msra.mxu0 0
    %108 = vmatpush.bf16.msra.mxu0 0
    %109 = vmatpush.bf16.msra.mxu0 0
    %110 = vmatpush.bf16.msra.mxu0 0
    %111 = vmatpush.bf16.msra.mxu0 0
    %112 = vmatpush.bf16.msra.mxu0 0
    %113 = vmatpush.bf16.msra.mxu0 %v100
    %114 = vmatmul.bf16.gmra.mxu0 %v104
    %v115 = vpop.f32.mrf.mxu0
    %v116 = vadd.f32 %v94, %v115
    %v117 = vpop.f32.mrf.mxu0
    %118 = vdwg.mxu0
    %v119 = vtanh.pop %v116
    %v120 = vpack.c.bf16 %v119, %v119
    %v121 = vld [vmem:[#allocation7] sm:$0xf]
    %v122 = vld [vmem:[#allocation7 + $0x4] sm:$0xf]
    %v123 = vld [vmem:[#allocation7 + $0x8] sm:$0xf]
    %v124 = vld [vmem:[#allocation7 + $0xc] sm:$0xf]
    %v125 = vld [vmem:[%s4] sm:$0x1]
    %v127 = vperm.slane %v125, 0
    %v133 = vunpack.c.l.b16 %v121
    %v134 = vunpack.c.l.b16 %v122
    %v135 = vunpack.c.l.b16 %v123
    %v136 = vunpack.c.l.b16 %v124
    %v137 = vpack.c.b16 %v134, %v133
    %v138 = vpack.c.b16 %v136, %v135
    %vm141 = vcmask 261120
    %v143 = vsel %vm141, %v120, 0
    %145 = vmatpush.bf16.msra.mxu0 0
    %146 = vmatpush.bf16.msra.mxu0 0
    %147 = vmatpush.bf16.msra.mxu0 0
    %148 = vmatpush.bf16.msra.mxu0 0
    %149 = vmatpush.bf16.msra.mxu0 0
    %150 = vmatpush.bf16.msra.mxu0 0
    %151 = vmatpush.bf16.msra.mxu0 %v138
    %152 = vmatpush.bf16.msra.mxu0 %v137
    %153 = vmatmul.bf16.gmra.mxu0 %v143
    %v154 = vpop.f32.mrf.mxu0
    %v155 = vadd.f32 %v127, %v154
    %v156 = vpop.f32.mrf.mxu0
    %157 = vdwg.mxu0
    %v158 = vtanh.pop %v155
    %v159 = vpack.c.bf16 %v158, %v158
    %v160 = vld [vmem:[#allocation8] sm:$0xf]
    %v161 = vld [vmem:[#allocation8 + $0x4] sm:$0xf]
    %v162 = vld [vmem:[#allocation8 + $0x8] sm:$0xf]
    %v163 = vld [vmem:[#allocation8 + $0xc] sm:$0xf]
    %v164 = vld [vmem:[%s6] sm:$0x1]
    %v166 = vperm.slane %v164, 0
    %v172 = vunpack.c.l.b16 %v160
    %v173 = vunpack.c.l.b16 %v161
    %v174 = vunpack.c.l.b16 %v162
    %v175 = vunpack.c.l.b16 %v163
    %v176 = vpack.c.b16 %v173, %v172
    %v177 = vpack.c.b16 %v175, %v174
    %v181 = vsel %vm141, %v159, 0
    %183 = vmatpush.bf16.msra.mxu0 0
    %184 = vmatpush.bf16.msra.mxu0 0
    %185 = vmatpush.bf16.msra.mxu0 0
    %186 = vmatpush.bf16.msra.mxu0 0
    %187 = vmatpush.bf16.msra.mxu0 0
    %188 = vmatpush.bf16.msra.mxu0 0
    %189 = vmatpush.bf16.msra.mxu0 %v177
    %190 = vmatpush.bf16.msra.mxu0 %v176
    %191 = vmatmul.bf16.gmra.mxu0 %v181
    %v192 = vpop.f32.mrf.mxu0
    %v193 = vadd.f32 %v166, %v192
    %v194 = vpop.f32.mrf.mxu0
    %195 = vdwg.mxu0
    %196 = vst [vmem:[#allocation10] sm:$0xff] %v193
    // Predicated region
    $region46: #{tpu_custom_call.1} parent=1 // pred_check
      _
    $region47: #{tpu_custom_call.1} parent=1 // pred_check_branch
      %198 = sbr.rel (0) target = $region49
    $region48: #{tpu_custom_call.1} parent=1 // pred_region
      %200 = vsyncadd [#allocation4], 0
      %s202 = sshll.u32 [#allocation10], 4
      %s203 = int_to_ptr.vmem [resolvable:$true] %s202
      %s204 = sshll.u32 %s7, 4
      %s205 = int_to_ptr.hbm [resolvable:$true] %s204
      %207 = dma.vmem_to_hbm [thread:$0]  %s203, 128, %s205, [#allocation4]
    $region49: #{tpu_custom_call.1} parent=1 // pred_fallthru
      _
    // Predicated region
    $region50: #{tpu_custom_call.1} parent=1 // pred_check
      _
    $region51: #{tpu_custom_call.1} parent=1 // pred_check_branch
      %209 = sbr.rel (0) target = $region53
    $region52: #{tpu_custom_call.1} parent=1 // pred_region
      %211 = dma.done [#allocation4], 128
    $region53: #{tpu_custom_call.1} parent=1 // pred_fallthru
      _
    %212 = vsyncpa [#allocation3], 1
    %213 = vsyncpa [#allocation6], 1
    %214 = vsyncpa [#allocation9], 1
    %215 = vsyncpa [#allocation4], 1

</llo_original>
